<compile_context>
chip_gen: v7x
topology: tpu7x:2x2x1
jax: 0.10.0
libtpu: 0.0.40
codegen_flags: <defaults>
</compile_context>

<pallas_src>
import jax
import jax.numpy as jnp
from jax import lax
from jax.experimental import pallas as pl
from jax.experimental.pallas import tpu as pltpu

K = 5     # conv kernel size
PAD = 2   # "same" padding for 5x5 stride-1


def matmul_bn_relu_kernel(w_ref, scale_ref, bias_ref, p_ref, o_ref):
    # w_ref:     (Cout, K*K*Cin)   bf16 conv weights, columns ordered (kh, kw, ci)
    # scale_ref: (Cout, 1)         f32 folded BN scale  = gamma / sqrt(var+eps)
    # bias_ref:  (Cout, 1)         f32 folded BN bias   = beta + (conv_b - mean)*scale
    # p_ref:     (1, K*K*Cin, CT)  bf16 im2col patches for this (batch, column) tile
    # o_ref:     (1, Cout, CT)     output tile, channel-major (lane-dense: CT >= 128)
    acc = jnp.dot(w_ref[...], p_ref[0],
                  preferred_element_type=jnp.float32)           # (Cout, CT) f32 on MXU
    y = acc * scale_ref[...] + bias_ref[...]                    # fused conv-bias + BN
    o_ref[0] = jnp.maximum(y, 0.0).astype(o_ref.dtype)          # ReLU


def _pick_col_tile(hw, max_tile=2048):
    # Largest lane-dense column tile that divides HW (full extent if small).
    if hw <= max_tile:
        return hw
    for t in range(max_tile, 127, -128):
        if hw % t == 0:
            return t
    return hw


def conv2d_bn_relu(x_nchw, weight_oihw, conv_bias, gamma, beta,
                   running_mean, running_var, eps=1e-5):
    N, Cin, H, W = x_nchw.shape
    Cout = weight_oihw.shape[0]
    HW = H * W
    KKC = K * K * Cin

    # --- im2col in the wrapper (single pass), staying channel-major (NCHW):
    # patches[n, (kh*K + kw)*Cin + ci, h*W + w] = x_pad[n, ci, h+kh, w+kw]
    x_pad = jnp.pad(x_nchw, ((0, 0), (0, 0), (PAD, PAD), (PAD, PAD)))
    patches = jnp.stack(
        [x_pad[:, :, kh:kh + H, kw:kw + W]
         for kh in range(K) for kw in range(K)],
        axis=1)                                        # (N, K*K, Cin, H, W)
    patches = patches.reshape(N, KKC, HW).astype(jnp.bfloat16)

    # (Cout, Cin, K, K) -> (Cout, K*K*Cin), columns ordered (kh, kw, ci) to match.
    w_mat = jnp.transpose(weight_oihw, (0, 2, 3, 1)).reshape(Cout, KKC)
    w_mat = w_mat.astype(jnp.bfloat16)

    # Fold conv bias + BatchNorm (running stats) into per-channel scale/bias (f32).
    inv_std = 1.0 / jnp.sqrt(running_var + eps)
    scale = (gamma * inv_std).astype(jnp.float32).reshape(Cout, 1)
    bias = (beta + (conv_bias - running_mean) * gamma * inv_std
            ).astype(jnp.float32).reshape(Cout, 1)

    ct = _pick_col_tile(HW)
    grid = (N, HW // ct)

    out = pl.pallas_call(
        matmul_bn_relu_kernel,
        out_shape=jax.ShapeDtypeStruct((N, Cout, HW), x_nchw.dtype),
        grid_spec=pltpu.PrefetchScalarGridSpec(
            num_scalar_prefetch=0,
            grid=grid,
            in_specs=[
                pl.BlockSpec((Cout, KKC), lambda n, j: (0, 0)),   # weights (resident)
                pl.BlockSpec((Cout, 1), lambda n, j: (0, 0)),     # BN scale
                pl.BlockSpec((Cout, 1), lambda n, j: (0, 0)),     # BN bias
                pl.BlockSpec((1, KKC, ct), lambda n, j: (n, 0, j)),  # patch tile
            ],
            out_specs=pl.BlockSpec((1, Cout, ct), lambda n, j: (n, 0, j)),
        ),
        compiler_params=pltpu.CompilerParams(
            dimension_semantics=("parallel", "parallel")),
    )(w_mat, scale, bias, patches)

    # Output is already channel-major (N, Cout, H*W) -> free reshape to NCHW.
    return out.reshape(N, Cout, H, W)


def _reference(x, weight, conv_bias, gamma, beta, mean, var, eps=1e-5):
    y = lax.conv_general_dilated(
        x, weight, window_strides=(1, 1), padding=[(PAD, PAD), (PAD, PAD)],
        dimension_numbers=("NCHW", "OIHW", "NCHW"))
    y = y + conv_bias[None, :, None, None]
    y = (y - mean[None, :, None, None]) / jnp.sqrt(var[None, :, None, None] + eps)
    y = y * gamma[None, :, None, None] + beta[None, :, None, None]
    return jnp.maximum(y, 0.0)


if __name__ == "__main__":
    in_ch, out_ch = 4, 8
    N, H, W = 2, 16, 16

    key = jax.random.PRNGKey(0)
    kx, kw, kb, kg, kbe, km, kv = jax.random.split(key, 7)

    x = jax.random.normal(kx, (N, in_ch, H, W), jnp.float32)
    weight = jax.random.normal(kw, (out_ch, in_ch, K, K), jnp.float32) * 0.1
    conv_bias = jax.random.normal(kb, (out_ch,), jnp.float32) * 0.1
    gamma = 1.0 + 0.1 * jax.random.normal(kg, (out_ch,), jnp.float32)
    beta = 0.1 * jax.random.normal(kbe, (out_ch,), jnp.float32)
    running_mean = 0.1 * jax.random.normal(km, (out_ch,), jnp.float32)
    running_var = 0.5 + jnp.abs(jax.random.normal(kv, (out_ch,), jnp.float32))

    out = conv2d_bn_relu(x, weight, conv_bias, gamma, beta,
                         running_mean, running_var)
    out = jax.block_until_ready(out)

    ref = _reference(x, weight, conv_bias, gamma, beta,
                     running_mean, running_var)
    assert out.shape == (N, out_ch, H, W), out.shape
    # bf16 MXU operands (f32 accumulation) -> loosened tolerance vs f32 reference.
    assert jnp.allclose(out, ref, rtol=5e-2, atol=5e-2), \
        float(jnp.max(jnp.abs(out - ref)))

    print("KERNEL_OK")
</pallas_src>

<mosaic_0001>
module attributes {stable_mosaic.version = 11 : i64} {
  func.func @matmul_bn_relu_kernel(%arg0: i32, %arg1: i32, %arg2: memref<8x100xbf16, #tpu.memory_space<vmem>>, %arg3: memref<8x1xf32, #tpu.memory_space<vmem>>, %arg4: memref<8x1xf32, #tpu.memory_space<vmem>>, %arg5: memref<1x100x256xbf16, #tpu.memory_space<vmem>>, %arg6: memref<1x8x256xf32, #tpu.memory_space<vmem>>) attributes {dimension_semantics = [#tpu.dimension_semantics<parallel>, #tpu.dimension_semantics<parallel>], iteration_bounds = array<i64: 2, 1>, scalar_prefetch = 0 : i64, scratch_operands = 0 : i64, tpu.core_type = #tpu.core_type<tc>, window_params = [{pipeline_mode = #tpu.pipeline_mode<synchronous>, transform_indices = @transform_0, window_bounds = array<i64: 8, 100>}, {pipeline_mode = #tpu.pipeline_mode<synchronous>, transform_indices = @transform_1, window_bounds = array<i64: 8, 1>}, {pipeline_mode = #tpu.pipeline_mode<synchronous>, transform_indices = @transform_2, window_bounds = array<i64: 8, 1>}, {transform_indices = @transform_3, window_bounds = array<i64: 1, 100, 256>}, {transform_indices = @transform_4, window_bounds = array<i64: 1, 8, 256>}]} {
    %c0 = arith.constant 0 : index
    %c0_0 = arith.constant 0 : index
    %0 = vector.load %arg2[%c0, %c0_0] : memref<8x100xbf16, #tpu.memory_space<vmem>>, vector<8x100xbf16>
    %c0_1 = arith.constant 0 : index
    %c0_2 = arith.constant 0 : index
    %c0_3 = arith.constant 0 : index
    %1 = vector.load %arg5[%c0_1, %c0_2, %c0_3] : memref<1x100x256xbf16, #tpu.memory_space<vmem>>, vector<1x100x256xbf16>
    %2 = vector.shape_cast %1 : vector<1x100x256xbf16> to vector<100x256xbf16>
    %cst = arith.constant dense<0.000000e+00> : vector<8x256xf32>
    %3 = tpu.matmul %0, %2, %cst {dimension_numbers = #tpu.dot_dimension_numbers<[1], [0], [0], [1], [0, 0, 1, 1], [], []>} : vector<8x100xbf16>, vector<100x256xbf16>, vector<8x256xf32> -> vector<8x256xf32>
    %c0_4 = arith.constant 0 : index
    %c0_5 = arith.constant 0 : index
    %4 = vector.load %arg3[%c0_4, %c0_5] : memref<8x1xf32, #tpu.memory_space<vmem>>, vector<8x1xf32>
    %5 = vector.broadcast %4 : vector<8x1xf32> to vector<8x256xf32>
    %6 = arith.mulf %3, %5 : vector<8x256xf32>
    %c0_6 = arith.constant 0 : index
    %c0_7 = arith.constant 0 : index
    %7 = vector.load %arg4[%c0_6, %c0_7] : memref<8x1xf32, #tpu.memory_space<vmem>>, vector<8x1xf32>
    %8 = vector.broadcast %7 : vector<8x1xf32> to vector<8x256xf32>
    %9 = arith.addf %6, %8 : vector<8x256xf32>
    %cst_8 = arith.constant 0.000000e+00 : f32
    %10 = vector.broadcast %cst_8 : f32 to vector<8x256xf32>
    %11 = arith.maximumf %9, %10 : vector<8x256xf32>
    %c0_9 = arith.constant 0 : index
    %c0_10 = arith.constant 0 : index
    %c0_11 = arith.constant 0 : index
    %12 = vector.load %arg6[%c0_9, %c0_10, %c0_11] : memref<1x8x256xf32, #tpu.memory_space<vmem>>, vector<1x8x256xf32>
    %13 = vector.shape_cast %12 : vector<1x8x256xf32> to vector<8x256xf32>
    %14 = vector.shape_cast %11 : vector<8x256xf32> to vector<1x8x256xf32>
    tpu.vector_store %arg6[%c0_9, %c0_10, %c0_11], %14 {strides = array<i32>} : memref<1x8x256xf32, #tpu.memory_space<vmem>>, vector<1x8x256xf32>,
    return
  }
  func.func @transform_0(%arg0: i32, %arg1: i32) -> (i32, i32) {
    %c0_i32 = arith.constant 0 : i32
    %c0_i32_0 = arith.constant 0 : i32
    %c0_i32_1 = arith.constant 0 : i32
    return %c0_i32, %c0_i32_0 : i32, i32
  }
  func.func @transform_1(%arg0: i32, %arg1: i32) -> (i32, i32) {
    %c0_i32 = arith.constant 0 : i32
    %c0_i32_0 = arith.constant 0 : i32
    %c0_i32_1 = arith.constant 0 : i32
    return %c0_i32, %c0_i32_0 : i32, i32
  }
  func.func @transform_2(%arg0: i32, %arg1: i32) -> (i32, i32) {
    %c0_i32 = arith.constant 0 : i32
    %c0_i32_0 = arith.constant 0 : i32
    %c0_i32_1 = arith.constant 0 : i32
    return %c0_i32, %c0_i32_0 : i32, i32
  }
  func.func @transform_3(%arg0: i32, %arg1: i32) -> (i32, i32, i32) {
    %c0_i32 = arith.constant 0 : i32
    %c0_i32_0 = arith.constant 0 : i32
    return %arg0, %c0_i32, %arg1 : i32, i32, i32
  }
  func.func @transform_4(%arg0: i32, %arg1: i32) -> (i32, i32, i32) {
    %c0_i32 = arith.constant 0 : i32
    %c0_i32_0 = arith.constant 0 : i32
    return %arg0, %c0_i32, %arg1 : i32, i32, i32
  }
}

</mosaic_0001>

<llo_original>
// kernel: tpu_custom_call.1
$region0: #{tpu_custom_call.1}
  #allocation0 [shape = 'u32[]', space=smem, size = 0x4, offset = 0x4, fixed_abs, tag = 'smem constant byte address 0x4 - core index']
  #allocation1 [shape = 'u32[144,128]{1,0:T(1,128)}', space=vmem, size = 0x12000, scoped, tag = 'internal scratch']
  %s0 = inlined_call_operand.vmem [shape: bf16[8,100], index: 0, kind: input, shape index: {}]
  %s1 = inlined_call_operand.vmem [shape: f32[8,1], index: 1, kind: input, shape index: {}]
  %s2 = inlined_call_operand.vmem [shape: f32[8,1], index: 2, kind: input, shape index: {}]
  %s3 = inlined_call_operand.vmem [shape: bf16[2,100,256], index: 3, kind: input, shape index: {}]
  %s4 = inlined_call_operand.hbm [shape: f32[2,8,256], index: 4, kind: output, shape index: {}]
  %s5 = sld [smem:[#allocation0]]
  $region49: #{tpu_custom_call.1} parent=0
    _
  %s7 = ssub.s32 1, %s5
  %s8 = scalar_select 0, %s7, %s5
  $region1: #{tpu_custom_call.1} parent=0
    #allocation2 [shape = 'u8[16384]{0}', space=vmem, size = 0x4000, scoped, tag = 'output window, operand 0']
    #allocation3 [shape = 's32[2]{0}', space=sflag, size = 0x8, scoped, tag = 'scoped memory for tpu_custom_call.1']
    %9 = vsyncpa [#allocation3], 0
    %s10 = scalar_lea.sflag [#allocation3], 1
    %11 = vsyncpa %s10, 0
    loop: start=0, step=1, limit=4
    $region2: #{tpu_custom_call.1} parent=1 // loop_pre_header
      _
    $region3: #{tpu_custom_call.1} parent=1 // loop_header
      %s13 = sphi 0, %s17
      %p14 = scmp.ge.s32.totalorder %s13, 4
      %s20 = sphi 0, %s32
      %s21 = sphi 0, %s28
      %s22 = sphi 0, %s20
      %s23 = sphi 0, %s21
      %s24 = sphi 0, %s22
      %s25 = sphi 0, %s23
      %s33 = sphi 0, %s33
      %s35 = sphi 0, %s33
      %s36 = sphi 0, %s35
      %s50 = sphi 0, %s36
      %s54 = sphi 0, %s54
      %s56 = sphi 0, %s54
      %s57 = sphi 0, %s56
      %s71 = sphi 0, %s57
      %s75 = sphi 0, %s75
      %s77 = sphi 0, %s75
      %s78 = sphi 0, %s77
      %s92 = sphi 0, %s78
      %s100 = sphi 0, %s102
      %s103 = sphi 0, %s100
      %s104 = sphi 0, %s103
      %s120 = sphi 0, %s104
      %s128 = sphi 0, %s130
      %s131 = sphi 0, %s128
      %s132 = sphi 0, %s131
      %s148 = sphi 0, %s132
    $region4: #{tpu_custom_call.1} parent=1 // loop_header_branch
      %16 = sbr.rel (%p14) target = $region8
    $region5: #{tpu_custom_call.1} parent=1 // loop_body
      %s18 = ssub.s32 %s13, 1
      %s19 = ssub.s32 %s13, 2
      %s26 = sadd.s32 1, %s21
      %p27 = scmp.ge.s32.totalorder %s26, 1
      %s28 = scalar_select %p27, 0, %s26
      %s29 = sadd.s32 1, %s20
      %s30 = scalar_select %p27, %s29, %s20
      %p31 = scmp.ge.s32.totalorder %s30, 2
      %s32 = scalar_select %p31, 0, %s30
      %s34 = sadd.s32 %s33, 1
      %p37 = scmp.eq.s32.totalorder %s13, 1
      %p38 = scmp.ne.s32.totalorder %s33, %s35
      %p39 = scmp.eq.s32.totalorder %s13, 0
      %p40 = por %p38, %p39
      %p41 = scmp.ne.s32.totalorder %s33, %s35
      %p42 = scmp.eq.s32.totalorder %s18, 1
      %p43 = por %p41, %p42
      %p44 = scmp.ne.s32.totalorder %s35, %s36
      %p45 = scmp.eq.s32.totalorder %s18, 0
      %p46 = por %p44, %p45
      %p47 = scmp.ne.s32.totalorder %s35, %s36
      %p48 = scmp.eq.s32.totalorder %s19, 1
      %p49 = por %p47, %p48
      %p51 = scmp.ne.s32.totalorder %s36, %s50
      %p52 = scmp.eq.s32.totalorder %s19, 0
      %p53 = por %p51, %p52
      %s55 = sadd.s32 %s54, 1
      %p58 = scmp.eq.s32.totalorder %s13, 1
      %p59 = scmp.ne.s32.totalorder %s54, %s56
      %p60 = scmp.eq.s32.totalorder %s13, 0
      %p61 = por %p59, %p60
      %p62 = scmp.ne.s32.totalorder %s54, %s56
      %p63 = scmp.eq.s32.totalorder %s18, 1
      %p64 = por %p62, %p63
      %p65 = scmp.ne.s32.totalorder %s56, %s57
      %p66 = scmp.eq.s32.totalorder %s18, 0
      %p67 = por %p65, %p66
      %p68 = scmp.ne.s32.totalorder %s56, %s57
      %p69 = scmp.eq.s32.totalorder %s19, 1
      %p70 = por %p68, %p69
      %p72 = scmp.ne.s32.totalorder %s57, %s71
      %p73 = scmp.eq.s32.totalorder %s19, 0
      %p74 = por %p72, %p73
      %s76 = sadd.s32 %s75, 1
      %p79 = scmp.eq.s32.totalorder %s13, 1
      %p80 = scmp.ne.s32.totalorder %s75, %s77
      %p81 = scmp.eq.s32.totalorder %s13, 0
      %p82 = por %p80, %p81
      %p83 = scmp.ne.s32.totalorder %s75, %s77
      %p84 = scmp.eq.s32.totalorder %s18, 1
      %p85 = por %p83, %p84
      %p86 = scmp.ne.s32.totalorder %s77, %s78
      %p87 = scmp.eq.s32.totalorder %s18, 0
      %p88 = por %p86, %p87
      %p89 = scmp.ne.s32.totalorder %s77, %s78
      %p90 = scmp.eq.s32.totalorder %s19, 1
      %p91 = por %p89, %p90
      %p93 = scmp.ne.s32.totalorder %s78, %s92
      %p94 = scmp.eq.s32.totalorder %s19, 0
      %p95 = por %p93, %p94
      %s96 = ssub.s32 %s20, %s32
      %s97 = ssub.s32 %s21, %s28
      %s98 = sor.u32 %s96, %s97
      %p99 = scmp.eq.s32.totalorder %s98, 0
      %s101 = sadd.s32 %s100, 1
      %s102 = scalar_select %p99, %s100, %s101
      %p105 = pneg %p99
      %p106 = scmp.eq.s32.totalorder %s13, 1
      %p107 = por %p105, %p106
      %p108 = scmp.ne.s32.totalorder %s100, %s103
      %p109 = scmp.eq.s32.totalorder %s13, 0
      %p110 = por %p108, %p109
      %p111 = scmp.ne.s32.totalorder %s100, %s103
      %p112 = scmp.eq.s32.totalorder %s18, 1
      %p113 = por %p111, %p112
      %p114 = scmp.ne.s32.totalorder %s103, %s104
      %p115 = scmp.eq.s32.totalorder %s18, 0
      %p116 = por %p114, %p115
      %p117 = scmp.ne.s32.totalorder %s103, %s104
      %p118 = scmp.eq.s32.totalorder %s19, 1
      %p119 = por %p117, %p118
      %p121 = scmp.ne.s32.totalorder %s104, %s120
      %p122 = scmp.eq.s32.totalorder %s19, 0
      %p123 = por %p121, %p122
      %s124 = ssub.s32 %s20, %s32
      %s125 = ssub.s32 %s21, %s28
      %s126 = sor.u32 %s124, %s125
      %p127 = scmp.eq.s32.totalorder %s126, 0
      %s129 = sadd.s32 %s128, 1
      %s130 = scalar_select %p127, %s128, %s129
      %p133 = pneg %p127
      %p134 = scmp.eq.s32.totalorder %s13, 1
      %p135 = por %p133, %p134
      %p136 = scmp.ne.s32.totalorder %s128, %s131
      %p137 = scmp.eq.s32.totalorder %s13, 0
      %p138 = por %p136, %p137
      %p139 = scmp.ne.s32.totalorder %s128, %s131
      %p140 = scmp.eq.s32.totalorder %s18, 1
      %p141 = por %p139, %p140
      %p142 = scmp.ne.s32.totalorder %s131, %s132
      %p143 = scmp.eq.s32.totalorder %s18, 0
      %p144 = por %p142, %p143
      %p145 = scmp.ne.s32.totalorder %s131, %s132
      %p146 = scmp.eq.s32.totalorder %s19, 1
      %p147 = por %p145, %p146
      %p149 = scmp.ne.s32.totalorder %s132, %s148
      %p150 = scmp.eq.s32.totalorder %s19, 0
      %p151 = por %p149, %p150
      %p152 = scmp.le.s32.totalorder 1, %s13
      %p153 = scmp.lt.s32.totalorder %s13, 3
      %p154 = pnand %p152, %p153
      %p155 = pneg %p154
      // Predicated region
      $region9: #{tpu_custom_call.1} parent=5 // pred_check
        _
      $region10: #{tpu_custom_call.1} parent=5 // pred_check_branch
        %157 = sbr.rel (%p154) target = $region12
      $region11: #{tpu_custom_call.1} parent=5 // pred_region
        %s158 = ssub.s32 %s13, 1
        // Predicated region
        $region13: #{tpu_custom_call.1} parent=11 // pred_check
          %p159 = pneg %p46
        $region14: #{tpu_custom_call.1} parent=11 // pred_check_branch
          %161 = sbr.rel (%p159) target = $region16
        $region15: #{tpu_custom_call.1} parent=11 // pred_region
          _
        $region16: #{tpu_custom_call.1} parent=11 // pred_fallthru
          _
        // Predicated region
        $region17: #{tpu_custom_call.1} parent=11 // pred_check
          %p162 = pneg %p67
        $region18: #{tpu_custom_call.1} parent=11 // pred_check_branch
          %164 = sbr.rel (%p162) target = $region20
        $region19: #{tpu_custom_call.1} parent=11 // pred_region
          _
        $region20: #{tpu_custom_call.1} parent=11 // pred_fallthru
          _
        // Predicated region
        $region21: #{tpu_custom_call.1} parent=11 // pred_check
          %p165 = pneg %p88
        $region22: #{tpu_custom_call.1} parent=11 // pred_check_branch
          %167 = sbr.rel (%p165) target = $region24
        $region23: #{tpu_custom_call.1} parent=11 // pred_region
          _
        $region24: #{tpu_custom_call.1} parent=11 // pred_fallthru
          _
      $region12: #{tpu_custom_call.1} parent=5 // pred_fallthru
        _
      %p168 = scmp.lt.s32.totalorder %s13, 2
      // Predicated region
      $region25: #{tpu_custom_call.1} parent=5 // pred_check
        %p169 = pneg %p168
      $region26: #{tpu_custom_call.1} parent=5 // pred_check_branch
        %171 = sbr.rel (%p169) target = $region28
      $region27: #{tpu_custom_call.1} parent=5 // pred_region
        // Predicated region
        $region29: #{tpu_custom_call.1} parent=27 // pred_check
          %p172 = pneg %p110
        $region30: #{tpu_custom_call.1} parent=27 // pred_check_branch
          %174 = sbr.rel (%p172) target = $region32
        $region31: #{tpu_custom_call.1} parent=27 // pred_region
          %s175 = smul.u32 2, %s21
          %p176 = scmp.lt.s32.totalorder %s20, 1
          %s177 = scalar_select %p176, %s20, 1
          %p178 = scmp.lt.s32.totalorder %s175, 1
          %s179 = scalar_select %p178, %s175, 1
          %s180 = smul.addr %s177, 26
          %s181 = sadd.s32 %s179, %s180
          %s182 = smul.addr %s181, 4
          %s183 = scalar_lea.vmem %s3, %s182
          %s184 = smul.u32 2, %s21
        $region32: #{tpu_custom_call.1} parent=27 // pred_fallthru
          _
      $region28: #{tpu_custom_call.1} parent=5 // pred_fallthru
        _
      %p185 = scmp.le.s32.totalorder 1, %s13
      %p186 = scmp.lt.s32.totalorder %s13, 3
      %p187 = pnand %p185, %p186
      %p188 = pneg %p187
      // Predicated region
      $region33: #{tpu_custom_call.1} parent=5 // pred_check
        _
      $region34: #{tpu_custom_call.1} parent=5 // pred_check_branch
        %190 = sbr.rel (%p187) target = $region36
      $region35: #{tpu_custom_call.1} parent=5 // pred_region
        %s191 = ssub.s32 %s13, 1
        %p192 = pneg %p46
        %p193 = pneg %p43
        %p194 = pneg %p67
        %p195 = pneg %p64
        %p196 = pneg %p88
        %p197 = pneg %p85
        %s198 = smul.u32 2, %s23
        %p199 = scmp.lt.s32.totalorder %s22, 1
        %s200 = scalar_select %p199, %s22, 1
        %p201 = scmp.lt.s32.totalorder %s198, 1
        %s202 = scalar_select %p201, %s198, 1
        %s203 = smul.addr %s200, 26
        %s204 = sadd.s32 %s202, %s203
        %s205 = smul.addr %s204, 4
        %s206 = scalar_lea.vmem %s3, %s205
        %p207 = pneg %p116
        %p208 = pneg %p113
        %p209 = pneg %p144
        %p210 = pneg %p141
        %s211 = sand.u32 %s131, 1
        %s212 = scalar_lea.sflag [#allocation3], %s211
        %s213 = sand.u32 %s131, 1
        %s214 = smul.addr %s213, 16
        %s215 = scalar_lea.vmem [#allocation2], %s214
        %s216 = smul.u32 2, %s23
        %p217 = scmp.lt.s32.totalorder %s22, 1
        %s218 = scalar_select %p217, %s22, 1
        %p219 = scmp.lt.s32.totalorder %s216, 1
        %s220 = scalar_select %p219, %s216, 1
        %s221 = smul.addr %s218, 26
        %s222 = sadd.s32 %s220, %s221
        %s223 = smul.addr %s222, 4
        %s224 = scalar_lea.vmem %s3, %s223
        %s225 = smul.u32 2, %s23
        %s226 = smul.u32 2, %s23
        %v228 = vld [vmem:[%s0] sm:$0xf]
        %v229 = vld [vmem:[%s224] sm:$0xff]
        %v230 = vld [vmem:[%s224 + $0x8] sm:$0xff]
        %v231 = vld [vmem:[%s224 + $0x10] sm:$0xff]
        %v232 = vld [vmem:[%s224 + $0x18] sm:$0xff]
        %v233 = vld [vmem:[%s224 + $0x20] sm:$0xff]
        %v234 = vld [vmem:[%s224 + $0x28] sm:$0xff]
        %v235 = vld [vmem:[%s224 + $0x30] sm:$0xff]
        %v236 = vld [vmem:[%s224 + $0x38] sm:$0xff]
        %v237 = vld [vmem:[%s224 + $0x40] sm:$0xff]
        %v238 = vld [vmem:[%s224 + $0x48] sm:$0xff]
        %v239 = vld [vmem:[%s224 + $0x50] sm:$0xff]
        %v240 = vld [vmem:[%s224 + $0x58] sm:$0xff]
        %v241 = vld [vmem:[%s224 + $0x60] sm:$0x33]
        %v255 = vunpack.c.l.b16 %v229
        %v256 = vunpack.c.h.b16 %v229
        %v257 = vunpack.c.l.b16 %v230
        %v258 = vunpack.c.h.b16 %v230
        %v259 = vunpack.c.l.b16 %v231
        %v260 = vunpack.c.h.b16 %v231
        %v261 = vunpack.c.l.b16 %v232
        %v262 = vunpack.c.h.b16 %v232
        %v263 = vunpack.c.l.b16 %v233
        %v264 = vunpack.c.h.b16 %v233
        %v265 = vunpack.c.l.b16 %v234
        %v266 = vunpack.c.h.b16 %v234
        %v267 = vunpack.c.l.b16 %v235
        %v268 = vunpack.c.h.b16 %v235
        %v269 = vunpack.c.l.b16 %v236
        %v270 = vunpack.c.h.b16 %v236
        %v271 = vunpack.c.l.b16 %v237
        %v272 = vunpack.c.h.b16 %v237
        %v273 = vunpack.c.l.b16 %v238
        %v274 = vunpack.c.h.b16 %v238
        %v275 = vunpack.c.l.b16 %v239
        %v276 = vunpack.c.h.b16 %v239
        %v277 = vunpack.c.l.b16 %v240
        %v278 = vunpack.c.h.b16 %v240
        %v279 = vunpack.c.l.b16 %v241
        %v280 = vunpack.c.h.b16 %v241
        %v281 = vpack.c.b16 %v257, %v255
        %v282 = vpack.c.b16 %v258, %v256
        %v283 = vpack.c.b16 %v261, %v259
        %v284 = vpack.c.b16 %v262, %v260
        %v285 = vpack.c.b16 %v265, %v263
        %v286 = vpack.c.b16 %v266, %v264
        %v287 = vpack.c.b16 %v269, %v267
        %v288 = vpack.c.b16 %v270, %v268
        %v289 = vpack.c.b16 %v273, %v271
        %v290 = vpack.c.b16 %v274, %v272
        %v291 = vpack.c.b16 %v277, %v275
        %v292 = vpack.c.b16 %v278, %v276
        %v293 = vpack.c.b16 %v279, %v279
        %v294 = vpack.c.b16 %v280, %v280
        %vm307 = vcmask 818176
        %v309 = vsel %vm307, %v228, 0
        %vm311 = vcmask 1041408
        %v313 = vsel %vm311, %v293, 0
        %v316 = vsel %vm311, %v294, 0
        %318 = vmatprep.subr.bf16.mxu0 %v282
        %319 = vmatpush1.bf16.msra.mxu0 %v281
        %320 = vmatprep.subr.bf16.mxu0 %v284
        %321 = vmatpush1.bf16.msra.mxu0 %v283
        %322 = vmatprep.subr.bf16.mxu0 %v286
        %323 = vmatpush1.bf16.msra.mxu0 %v285
        %324 = vmatprep.subr.bf16.mxu0 %v288
        %325 = vmatpush1.bf16.msra.mxu0 %v287
        %326 = vmatprep.subr.bf16.mxu0 %v290
        %327 = vmatpush1.bf16.msra.mxu0 %v289
        %328 = vmatprep.subr.bf16.mxu0 %v292
        %329 = vmatpush1.bf16.msra.mxu0 %v291
        %330 = vmatprep.subr.bf16.mxu0 %v316
        %331 = vmatpush1.bf16.msra.mxu0 %v313
        %332 = vmatprep.subr.bf16.mxu0 0
        %333 = vmatpush1.bf16.msra.mxu0 0
        %334 = vmatprep.subr.bf16.mxu0 0
        %335 = vmatpush1.bf16.msra.mxu0 0
        %336 = vmatprep.subr.bf16.mxu0 0
        %337 = vmatpush1.bf16.msra.mxu0 0
        %338 = vmatprep.subr.bf16.mxu0 0
        %339 = vmatpush1.bf16.msra.mxu0 0
        %340 = vmatprep.subr.bf16.mxu0 0
        %341 = vmatpush1.bf16.msra.mxu0 0
        %342 = vmatprep.subr.bf16.mxu0 0
        %343 = vmatpush1.bf16.msra.mxu0 0
        %344 = vmatprep.subr.bf16.mxu0 0
        %345 = vmatpush1.bf16.msra.mxu0 0
        %346 = vmatprep.subr.bf16.mxu0 0
        %347 = vmatpush1.bf16.msra.mxu0 0
        %348 = vmatprep.subr.bf16.mxu0 0
        %349 = vmatpush1.bf16.msra.mxu0 0
        %350 = vmatprep.mubr.bf16.mxu0 0
        %351 = vmatmul.mubr.bf16.gmra.mrb[0].mxu0 %v309
        %v352 = vpop.f32.mrb[0].mxu0
        %v353 = vadd.f32 0.0, %v352
        %v354 = vpop.f32.mrb[0].mxu0
        %v355 = vadd.f32 0.0, %v354
        %v356 = vpop.f32.mrb[0].mxu0
        %v357 = vpop.f32.mrb[0].mxu0
        %358 = vdwg.mxu0
        %v359 = vld [vmem:[%s1] sm:$0xff]
        %361 = vset.pattern.permute.xlu0 0
        %362 = vperm.xlu0 %361, %v359
        %v363 = vpop.permute.xlu0 %362
        %v365 = vmul.f32 %v353, %v363
        %v366 = vmul.f32 %v355, %v363
        %v367 = vld [vmem:[%s2] sm:$0xff]
        %369 = vset.pattern.permute.xlu0 0
        %370 = vperm.xlu0 %369, %v367
        %v371 = vpop.permute.xlu0 %370
        %v373 = vadd.f32 %v365, %v371
        %v374 = vadd.f32 %v366, %v371
        %v375 = vmax.f32 %v373, 0.0
        %v376 = vmax.f32 %v374, 0.0
        %377 = vst [vmem:[%s215] sm:$0xff] %v375
        %378 = vst [vmem:[%s215 + $0x8] sm:$0xff] %v376
        %s379 = sand.u32 %s131, 1
        %s380 = scalar_lea.sflag [#allocation3], %s379
        %s381 = sand.u32 %s131, 1
        %s382 = smul.addr %s381, 16
        %s383 = scalar_lea.vmem [#allocation2], %s382
        // Predicated region
        $region37: #{tpu_custom_call.1} parent=35 // pred_check
          %p384 = pneg %p141
        $region38: #{tpu_custom_call.1} parent=35 // pred_check_branch
          %386 = sbr.rel (%p384) target = $region40
        $region39: #{tpu_custom_call.1} parent=35 // pred_region
          %s387 = smul.u32 2, %s23
          %s389 = ssub.s32 256, 256
          %390 = vsyncadd %s380, %s389
          %s391 = smul.addr %s22, 2
          %s392 = sadd.s32 %s387, %s391
          %s393 = smul.addr %s392, 128
          %s394 = scalar_lea.hbm %s4, %s393
          %s396 = sshll.u32 %s383, 4
          %s397 = int_to_ptr.vmem [resolvable:$true] %s396
          %399 = dma.vmem_to_hbm [thread:$0]  %s397, 256, %s394, %s380
        $region40: #{tpu_custom_call.1} parent=35 // pred_fallthru
          _
      $region36: #{tpu_custom_call.1} parent=5 // pred_fallthru
        _
      %p400 = scmp.le.s32.totalorder 2, %s13
      // Predicated region
      $region41: #{tpu_custom_call.1} parent=5 // pred_check
        %p401 = pneg %p400
      $region42: #{tpu_custom_call.1} parent=5 // pred_check_branch
        %403 = sbr.rel (%p401) target = $region44
      $region43: #{tpu_custom_call.1} parent=5 // pred_region
        %s404 = ssub.s32 %s13, 2
        // Predicated region
        $region45: #{tpu_custom_call.1} parent=43 // pred_check
          %p405 = pneg %p147
        $region46: #{tpu_custom_call.1} parent=43 // pred_check_branch
          %407 = sbr.rel (%p405) target = $region48
        $region47: #{tpu_custom_call.1} parent=43 // pred_region
          %s408 = sand.u32 %s132, 1
          %s409 = scalar_lea.sflag [#allocation3], %s408
          %s410 = sand.u32 %s132, 1
          %s411 = smul.addr %s410, 16
          %s412 = scalar_lea.vmem [#allocation2], %s411
          %413 = dma.done %s409, 256
        $region48: #{tpu_custom_call.1} parent=43 // pred_fallthru
          _
      $region44: #{tpu_custom_call.1} parent=5 // pred_fallthru
        _
    $region6: #{tpu_custom_call.1} parent=1 // loop_footer
      %s17 = sadd.s32 1, %s13
    $region7: #{tpu_custom_call.1} parent=1 // loop_footer_branch
      %12 = sbr.rel target = $region3
    $region8: #{tpu_custom_call.1} parent=1 // loop_exit
      _
    %414 = vsyncpa [#allocation3], 1
    %s415 = scalar_lea.sflag [#allocation3], 1
    %416 = vsyncpa %s415, 1

</llo_original>
